<compile_context>
chip_gen: v5e
topology: v5e:2x2
jax: 0.10.0
libtpu: 0.0.40
codegen_flags: <defaults>
</compile_context>

<pallas_src>
import jax
import jax.numpy as jnp
from jax.experimental import pallas as pl
from jax.experimental.pallas import tpu as pltpu


def _mlp_kernel(x_ref,
                w1_ref, b1_ref,
                w2_ref, b2_ref,
                w3_ref, b3_ref,
                w4_ref, b4_ref,
                o_ref):
    # x_ref holds one lane-dense, feature-major tile: (13, TILE_B).
    xt = x_ref[...]
    hi = jax.lax.Precision.HIGHEST  # keep the f32 matmuls exact (bf16x3/x6)

    # Weights are PyTorch-layout (out, in); biases are (out, 1) columns that
    # broadcast across the lane (batch) axis.
    h = jnp.tanh(
        jnp.dot(w1_ref[...], xt, precision=hi,
                preferred_element_type=jnp.float32) + b1_ref[...]
    )
    h = jnp.tanh(
        jnp.dot(w2_ref[...], h, precision=hi,
                preferred_element_type=jnp.float32) + b2_ref[...]
    )
    h = jnp.tanh(
        jnp.dot(w3_ref[...], h, precision=hi,
                preferred_element_type=jnp.float32) + b3_ref[...]
    )
    logits = (
        jnp.dot(w4_ref[...], h, precision=hi,
                preferred_element_type=jnp.float32) + b4_ref[...]
    )  # (3, TILE_B)

    # Numerically-stable softmax over the class axis (axis 0 here == PyTorch
    # dim=-1).  One exact divide on the (1, TILE_B) denominator row, then
    # cheap VPU multiplies for the 3 class rows (EUP-slot friendly; approx
    # reciprocal would break the 1e-5 tolerance so it is NOT used).
    m = jnp.max(logits, axis=0, keepdims=True)
    e = jnp.exp(logits - m)
    inv = 1.0 / jnp.sum(e, axis=0, keepdims=True)
    o_ref[...] = e * inv


def _round_up(n, m):
    return ((n + m - 1) // m) * m


def _pick_tile(batch, tile_b):
    """Choose a lane-dense batch tile (multiple of 128).

    Big tiles amortize the per-grid-step overhead; but keep >= 2 grid steps
    whenever the batch spans more than one 128-lane group so the parallel
    grid axis can shard across both TensorCores on v7x and the pipeline has
    something to overlap.
    """
    tile_b = max(128, (int(tile_b) // 128) * 128)
    padded128 = _round_up(batch, 128)
    tile_b = min(tile_b, padded128)
    if padded128 > 128:
        half = _round_up(padded128 // 2, 128)
        tile_b = min(tile_b, half)
    return tile_b


def mlp_forward_feature_major(xt, params, *, tile_b=32768):
    """Feature-major forward pass (the preferred, transpose-free entry).

    xt: (13, batch) float32, returns (3, batch) float32.
    Weights are PyTorch-style (out_features, in_features); biases (out, 1).
    """
    in_l, batch = xt.shape
    out_l = params["w4"].shape[0]

    tile_b = _pick_tile(batch, tile_b)
    padded = _round_up(batch, tile_b)
    grid = (padded // tile_b,)

    if padded != batch:
        # Pad columns with zeros; padded outputs are sliced away below.
        xt = jnp.pad(xt, ((0, 0), (0, padded - batch)))

    def full_spec(arr):
        # Whole-array VMEM block, same block for every grid step (resident).
        return pl.BlockSpec(arr.shape, lambda i: (0, 0))

    weight_args = (
        params["w1"], params["b1"],
        params["w2"], params["b2"],
        params["w3"], params["b3"],
        params["w4"], params["b4"],
    )

    # Double-buffered in/out blocks + in-kernel intermediates; scale the
    # scoped-VMEM budget with the tile (cap well under v7x's 64 MiB per TC).
    block_bytes = (in_l + out_l) * tile_b * 4
    vmem_limit = int(min(48 * 1024 * 1024,
                         max(16 * 1024 * 1024, 10 * block_bytes)))

    out_t = pl.pallas_call(
        _mlp_kernel,
        out_shape=jax.ShapeDtypeStruct((out_l, padded), jnp.float32),
        grid=grid,
        in_specs=[pl.BlockSpec((in_l, tile_b), lambda i: (0, i))]
                 + [full_spec(a) for a in weight_args],
        out_specs=pl.BlockSpec((out_l, tile_b), lambda i: (0, i)),
        compiler_params=pltpu.CompilerParams(
            dimension_semantics=("parallel",),   # megacore sharding on v7x
            vmem_limit_bytes=vmem_limit,
        ),
    )(xt, *weight_args)

    if padded != batch:
        out_t = out_t[:, :batch]
    return out_t


def mlp_forward(x, params, *, tile_b=32768):
    """PyTorch-layout forward pass.  x: (batch, 13) float32 -> (batch, 3).

    NOTE: this wrapper transposes at the call boundary (an extra HBM pass per
    side).  In a real pipeline keep activations feature-major end-to-end and
    call mlp_forward_feature_major directly.  For batch < ~4K a plain jitted
    JAX expression would also be at least as fast as launching the kernel.
    """
    out_t = mlp_forward_feature_major(x.T, params, tile_b=tile_b)
    return out_t.T


def init_params(key, input_l=13, h1=10, h2=8, h3=5, output_l=3):
    """Deterministic init mimicking nn.Linear's U(-1/sqrt(fan_in), 1/sqrt(fan_in)).

    Weights are stored PyTorch-style as (out_features, in_features).
    Biases are stored as (out_features, 1).
    """
    dims = [(input_l, h1), (h1, h2), (h2, h3), (h3, output_l)]
    params = {}
    for idx, (fan_in, fan_out) in enumerate(dims, start=1):
        key, kw, kb = jax.random.split(key, 3)
        bound = 1.0 / jnp.sqrt(jnp.float32(fan_in))
        params[f"w{idx}"] = jax.random.uniform(
            kw, (fan_out, fan_in), jnp.float32, minval=-bound, maxval=bound
        )
        params[f"b{idx}"] = jax.random.uniform(
            kb, (fan_out, 1), jnp.float32, minval=-bound, maxval=bound
        )
    return params


def _reference_forward(x, params):
    """Pure-JAX reference of the PyTorch forward, for sanity checking."""
    hi = jax.lax.Precision.HIGHEST
    h = jnp.tanh(jnp.dot(x, params["w1"].T, precision=hi) + params["b1"].T)
    h = jnp.tanh(jnp.dot(h, params["w2"].T, precision=hi) + params["b2"].T)
    h = jnp.tanh(jnp.dot(h, params["w3"].T, precision=hi) + params["b3"].T)
    logits = jnp.dot(h, params["w4"].T, precision=hi) + params["b4"].T
    return jax.nn.softmax(logits, axis=-1)


if __name__ == "__main__":
    key = jax.random.PRNGKey(0)
    key, kx = jax.random.split(key)

    input_l, output_l = 13, 3
    params = init_params(key, input_l=input_l, h1=10, h2=8, h3=5, output_l=output_l)

    # Small shape matching the module spec (pads to a single 128-lane tile).
    batch = 8
    x = jax.random.normal(kx, (batch, input_l), jnp.float32)
    out = jax.block_until_ready(mlp_forward(x, params))
    ref = _reference_forward(x, params)
    assert out.shape == (batch, output_l)
    assert jnp.allclose(out, ref, atol=1e-5, rtol=1e-5)
    assert jnp.allclose(jnp.sum(out, axis=-1), jnp.ones((batch,)), atol=1e-5)

    # Second run exercising the multi-tile grid + padding path: batch=300
    # auto-splits into a 2-step parallel grid (tile_b capped to 256 lanes).
    key, kx2 = jax.random.split(key)
    batch2 = 300
    x2 = jax.random.normal(kx2, (batch2, input_l), jnp.float32)
    out2 = jax.block_until_ready(mlp_forward(x2, params))
    ref2 = _reference_forward(x2, params)
    assert out2.shape == (batch2, output_l)
    assert jnp.allclose(out2, ref2, atol=1e-5, rtol=1e-5)

    # Third run through the preferred feature-major entry (no wrapper
    # transpose), exact same semantics.
    out3 = jax.block_until_ready(mlp_forward_feature_major(x2.T, params))
    assert out3.shape == (output_l, batch2)
    assert jnp.allclose(out3.T, ref2, atol=1e-5, rtol=1e-5)

    print("KERNEL_OK")
</pallas_src>

<mosaic_0001>
module attributes {stable_mosaic.version = 11 : i64} {
  func.func @_mlp_kernel(%arg0: i32, %arg1: memref<13x128xf32, #tpu.memory_space<vmem>>, %arg2: memref<10x13xf32, #tpu.memory_space<vmem>>, %arg3: memref<10x1xf32, #tpu.memory_space<vmem>>, %arg4: memref<8x10xf32, #tpu.memory_space<vmem>>, %arg5: memref<8x1xf32, #tpu.memory_space<vmem>>, %arg6: memref<5x8xf32, #tpu.memory_space<vmem>>, %arg7: memref<5x1xf32, #tpu.memory_space<vmem>>, %arg8: memref<3x5xf32, #tpu.memory_space<vmem>>, %arg9: memref<3x1xf32, #tpu.memory_space<vmem>>, %arg10: memref<3x128xf32, #tpu.memory_space<vmem>>) attributes {dimension_semantics = [#tpu.dimension_semantics<parallel>], iteration_bounds = array<i64: 1>, scalar_prefetch = 0 : i64, scratch_operands = 0 : i64, tpu.core_type = #tpu.core_type<tc>, window_params = [{transform_indices = @transform_0, window_bounds = array<i64: 13, 128>}, {pipeline_mode = #tpu.pipeline_mode<synchronous>, transform_indices = @transform_1, window_bounds = array<i64: 10, 13>}, {pipeline_mode = #tpu.pipeline_mode<synchronous>, transform_indices = @transform_2, window_bounds = array<i64: 10, 1>}, {pipeline_mode = #tpu.pipeline_mode<synchronous>, transform_indices = @transform_3, window_bounds = array<i64: 8, 10>}, {pipeline_mode = #tpu.pipeline_mode<synchronous>, transform_indices = @transform_4, window_bounds = array<i64: 8, 1>}, {pipeline_mode = #tpu.pipeline_mode<synchronous>, transform_indices = @transform_5, window_bounds = array<i64: 5, 8>}, {pipeline_mode = #tpu.pipeline_mode<synchronous>, transform_indices = @transform_6, window_bounds = array<i64: 5, 1>}, {pipeline_mode = #tpu.pipeline_mode<synchronous>, transform_indices = @transform_7, window_bounds = array<i64: 3, 5>}, {pipeline_mode = #tpu.pipeline_mode<synchronous>, transform_indices = @transform_8, window_bounds = array<i64: 3, 1>}, {transform_indices = @transform_9, window_bounds = array<i64: 3, 128>}]} {
    %c0 = arith.constant 0 : index
    %c0_0 = arith.constant 0 : index
    %0 = vector.load %arg1[%c0, %c0_0] : memref<13x128xf32, #tpu.memory_space<vmem>>, vector<13x128xf32>
    %c0_1 = arith.constant 0 : index
    %c0_2 = arith.constant 0 : index
    %1 = vector.load %arg2[%c0_1, %c0_2] : memref<10x13xf32, #tpu.memory_space<vmem>>, vector<10x13xf32>
    %cst = arith.constant dense<0.000000e+00> : vector<10x128xf32>
    %2 = tpu.matmul %1, %0, %cst {dimension_numbers = #tpu.dot_dimension_numbers<[1], [0], [0], [1], [0, 0, 1, 1], [], []>, precision = #tpu.contract_precision<fp32>} : vector<10x13xf32>, vector<13x128xf32>, vector<10x128xf32> -> vector<10x128xf32>
    %c0_3 = arith.constant 0 : index
    %c0_4 = arith.constant 0 : index
    %3 = vector.load %arg3[%c0_3, %c0_4] : memref<10x1xf32, #tpu.memory_space<vmem>>, vector<10x1xf32>
    %4 = vector.broadcast %3 : vector<10x1xf32> to vector<10x128xf32>
    %5 = arith.addf %2, %4 : vector<10x128xf32>
    %6 = math.tanh %5 : vector<10x128xf32>
    %c0_5 = arith.constant 0 : index
    %c0_6 = arith.constant 0 : index
    %7 = vector.load %arg4[%c0_5, %c0_6] : memref<8x10xf32, #tpu.memory_space<vmem>>, vector<8x10xf32>
    %cst_7 = arith.constant dense<0.000000e+00> : vector<8x128xf32>
    %8 = tpu.matmul %7, %6, %cst_7 {dimension_numbers = #tpu.dot_dimension_numbers<[1], [0], [0], [1], [0, 0, 1, 1], [], []>, precision = #tpu.contract_precision<fp32>} : vector<8x10xf32>, vector<10x128xf32>, vector<8x128xf32> -> vector<8x128xf32>
    %c0_8 = arith.constant 0 : index
    %c0_9 = arith.constant 0 : index
    %9 = vector.load %arg5[%c0_8, %c0_9] : memref<8x1xf32, #tpu.memory_space<vmem>>, vector<8x1xf32>
    %10 = vector.broadcast %9 : vector<8x1xf32> to vector<8x128xf32>
    %11 = arith.addf %8, %10 : vector<8x128xf32>
    %12 = math.tanh %11 : vector<8x128xf32>
    %c0_10 = arith.constant 0 : index
    %c0_11 = arith.constant 0 : index
    %13 = vector.load %arg6[%c0_10, %c0_11] : memref<5x8xf32, #tpu.memory_space<vmem>>, vector<5x8xf32>
    %cst_12 = arith.constant dense<0.000000e+00> : vector<5x128xf32>
    %14 = tpu.matmul %13, %12, %cst_12 {dimension_numbers = #tpu.dot_dimension_numbers<[1], [0], [0], [1], [0, 0, 1, 1], [], []>, precision = #tpu.contract_precision<fp32>} : vector<5x8xf32>, vector<8x128xf32>, vector<5x128xf32> -> vector<5x128xf32>
    %c0_13 = arith.constant 0 : index
    %c0_14 = arith.constant 0 : index
    %15 = vector.load %arg7[%c0_13, %c0_14] : memref<5x1xf32, #tpu.memory_space<vmem>>, vector<5x1xf32>
    %16 = vector.broadcast %15 : vector<5x1xf32> to vector<5x128xf32>
    %17 = arith.addf %14, %16 : vector<5x128xf32>
    %18 = math.tanh %17 : vector<5x128xf32>
    %c0_15 = arith.constant 0 : index
    %c0_16 = arith.constant 0 : index
    %19 = vector.load %arg8[%c0_15, %c0_16] : memref<3x5xf32, #tpu.memory_space<vmem>>, vector<3x5xf32>
    %cst_17 = arith.constant dense<0.000000e+00> : vector<3x128xf32>
    %20 = tpu.matmul %19, %18, %cst_17 {dimension_numbers = #tpu.dot_dimension_numbers<[1], [0], [0], [1], [0, 0, 1, 1], [], []>, precision = #tpu.contract_precision<fp32>} : vector<3x5xf32>, vector<5x128xf32>, vector<3x128xf32> -> vector<3x128xf32>
    %c0_18 = arith.constant 0 : index
    %c0_19 = arith.constant 0 : index
    %21 = vector.load %arg9[%c0_18, %c0_19] : memref<3x1xf32, #tpu.memory_space<vmem>>, vector<3x1xf32>
    %22 = vector.broadcast %21 : vector<3x1xf32> to vector<3x128xf32>
    %23 = arith.addf %20, %22 : vector<3x128xf32>
    %cst_20 = arith.constant dense<0xFF800000> : vector<128xf32>
    %24 = vector.multi_reduction <maximumf>, %23, %cst_20 [0] : vector<3x128xf32> to vector<128xf32>
    %25 = vector.shape_cast %24 : vector<128xf32> to vector<1x128xf32>
    %26 = vector.broadcast %25 : vector<1x128xf32> to vector<3x128xf32>
    %27 = arith.subf %23, %26 : vector<3x128xf32>
    %28 = math.exp %27 : vector<3x128xf32>
    %cst_21 = arith.constant dense<0.000000e+00> : vector<128xf32>
    %29 = vector.multi_reduction <add>, %28, %cst_21 [0] : vector<3x128xf32> to vector<128xf32>
    %30 = vector.shape_cast %29 : vector<128xf32> to vector<1x128xf32>
    %cst_22 = arith.constant 1.000000e+00 : f32
    %31 = vector.broadcast %cst_22 : f32 to vector<1x128xf32>
    %32 = arith.divf %31, %30 : vector<1x128xf32>
    %33 = vector.broadcast %32 : vector<1x128xf32> to vector<3x128xf32>
    %34 = arith.mulf %28, %33 : vector<3x128xf32>
    %c0_23 = arith.constant 0 : index
    %c0_24 = arith.constant 0 : index
    %35 = vector.load %arg10[%c0_23, %c0_24] : memref<3x128xf32, #tpu.memory_space<vmem>>, vector<3x128xf32>
    tpu.vector_store %arg10[%c0_23, %c0_24], %34 {strides = array<i32>} : memref<3x128xf32, #tpu.memory_space<vmem>>, vector<3x128xf32>,
    return
  }
  func.func @transform_0(%arg0: i32) -> (i32, i32) {
    %c0_i32 = arith.constant 0 : i32
    %c0_i32_0 = arith.constant 0 : i32
    return %c0_i32, %arg0 : i32, i32
  }
  func.func @transform_1(%arg0: i32) -> (i32, i32) {
    %c0_i32 = arith.constant 0 : i32
    %c0_i32_0 = arith.constant 0 : i32
    %c0_i32_1 = arith.constant 0 : i32
    return %c0_i32, %c0_i32_0 : i32, i32
  }
  func.func @transform_2(%arg0: i32) -> (i32, i32) {
    %c0_i32 = arith.constant 0 : i32
    %c0_i32_0 = arith.constant 0 : i32
    %c0_i32_1 = arith.constant 0 : i32
    return %c0_i32, %c0_i32_0 : i32, i32
  }
  func.func @transform_3(%arg0: i32) -> (i32, i32) {
    %c0_i32 = arith.constant 0 : i32
    %c0_i32_0 = arith.constant 0 : i32
    %c0_i32_1 = arith.constant 0 : i32
    return %c0_i32, %c0_i32_0 : i32, i32
  }
  func.func @transform_4(%arg0: i32) -> (i32, i32) {
    %c0_i32 = arith.constant 0 : i32
    %c0_i32_0 = arith.constant 0 : i32
    %c0_i32_1 = arith.constant 0 : i32
    return %c0_i32, %c0_i32_0 : i32, i32
  }
  func.func @transform_5(%arg0: i32) -> (i32, i32) {
    %c0_i32 = arith.constant 0 : i32
    %c0_i32_0 = arith.constant 0 : i32
    %c0_i32_1 = arith.constant 0 : i32
    return %c0_i32, %c0_i32_0 : i32, i32
  }
  func.func @transform_6(%arg0: i32) -> (i32, i32) {
    %c0_i32 = arith.constant 0 : i32
    %c0_i32_0 = arith.constant 0 : i32
    %c0_i32_1 = arith.constant 0 : i32
    return %c0_i32, %c0_i32_0 : i32, i32
  }
  func.func @transform_7(%arg0: i32) -> (i32, i32) {
    %c0_i32 = arith.constant 0 : i32
    %c0_i32_0 = arith.constant 0 : i32
    %c0_i32_1 = arith.constant 0 : i32
    return %c0_i32, %c0_i32_0 : i32, i32
  }
  func.func @transform_8(%arg0: i32) -> (i32, i32) {
    %c0_i32 = arith.constant 0 : i32
    %c0_i32_0 = arith.constant 0 : i32
    %c0_i32_1 = arith.constant 0 : i32
    return %c0_i32, %c0_i32_0 : i32, i32
  }
  func.func @transform_9(%arg0: i32) -> (i32, i32) {
    %c0_i32 = arith.constant 0 : i32
    %c0_i32_0 = arith.constant 0 : i32
    return %c0_i32, %arg0 : i32, i32
  }
}

</mosaic_0001>

<llo_original>
// kernel: tpu_custom_call.1
$region0: #{tpu_custom_call.1}
  #allocation0 [shape = 'u32[]', space=smem, size = 0x4, offset = 0x4, fixed_abs, tag = 'smem constant byte address 0x4 - core index']
  #allocation1 [shape = 'u32[72,128]{1,0:T(1,128)}', space=vmem, size = 0x9000, scoped, tag = 'internal scratch']
  %s0 = inlined_call_operand.vmem [shape: f32[13,128], index: 0, kind: input, shape index: {}]
  %s1 = inlined_call_operand.vmem [shape: f32[10,13], index: 1, kind: input, shape index: {}]
  %s2 = inlined_call_operand.vmem [shape: f32[10,1], index: 2, kind: input, shape index: {}]
  %s3 = inlined_call_operand.hbm [shape: f32[8,10], index: 3, kind: input, shape index: {}]
  %s4 = inlined_call_operand.vmem [shape: f32[8,1], index: 4, kind: input, shape index: {}]
  %s5 = inlined_call_operand.hbm [shape: f32[5,8], index: 5, kind: input, shape index: {}]
  %s6 = inlined_call_operand.vmem [shape: f32[5,1], index: 6, kind: input, shape index: {}]
  %s7 = inlined_call_operand.vmem [shape: f32[3,5], index: 7, kind: input, shape index: {}]
  %s8 = inlined_call_operand.vmem [shape: f32[3,1], index: 8, kind: input, shape index: {}]
  %s9 = inlined_call_operand.hbm [shape: f32[3,128], index: 9, kind: output, shape index: {}]
  %s10 = sld [smem:[#allocation0]]
  $region54: #{tpu_custom_call.1} parent=0
    _
  %s12 = ssub.s32 1, %s10
  %s13 = scalar_select 0, %s12, %s10
  $region1: #{tpu_custom_call.1} parent=0
    #allocation2 [shape = 'u8[4096]{0}', space=vmem, size = 0x1000, scoped, tag = 'input window, operand 3, single buffered']
    #allocation3 [shape = 's32[1]{0}', space=sflag, size = 0x4, scoped, tag = 'scoped memory for tpu_custom_call.1']
    #allocation4 [shape = 's32[1]{0}', space=sflag, size = 0x4, scoped, tag = 'scoped memory for tpu_custom_call.1']
    #allocation5 [shape = 'u8[4096]{0}', space=vmem, size = 0x1000, scoped, tag = 'input window, operand 5, single buffered']
    #allocation6 [shape = 's32[1]{0}', space=sflag, size = 0x4, scoped, tag = 'scoped memory for tpu_custom_call.1']
    #allocation7 [shape = 'u8[2048]{0}', space=vmem, size = 0x800, scoped, tag = 'output window, operand 0, single buffered']
    %14 = vsyncpa [#allocation3], 0
    %15 = vsyncpa [#allocation6], 0
    %16 = vsyncpa [#allocation4], 0
    // Predicated region
    $region2: #{tpu_custom_call.1} parent=1 // pred_check
      _
    $region3: #{tpu_custom_call.1} parent=1 // pred_check_branch
      %18 = sbr.rel (0) target = $region5
    $region4: #{tpu_custom_call.1} parent=1 // pred_region
      _
    $region5: #{tpu_custom_call.1} parent=1 // pred_fallthru
      _
    // Predicated region
    $region6: #{tpu_custom_call.1} parent=1 // pred_check
      _
    $region7: #{tpu_custom_call.1} parent=1 // pred_check_branch
      %20 = sbr.rel (0) target = $region9
    $region8: #{tpu_custom_call.1} parent=1 // pred_region
      _
    $region9: #{tpu_custom_call.1} parent=1 // pred_fallthru
      _
    // Predicated region
    $region10: #{tpu_custom_call.1} parent=1 // pred_check
      _
    $region11: #{tpu_custom_call.1} parent=1 // pred_check_branch
      %22 = sbr.rel (0) target = $region13
    $region12: #{tpu_custom_call.1} parent=1 // pred_region
      _
    $region13: #{tpu_custom_call.1} parent=1 // pred_fallthru
      _
    // Predicated region
    $region14: #{tpu_custom_call.1} parent=1 // pred_check
      _
    $region15: #{tpu_custom_call.1} parent=1 // pred_check_branch
      %24 = sbr.rel (0) target = $region17
    $region16: #{tpu_custom_call.1} parent=1 // pred_region
      %26 = vsyncadd [#allocation3], 0
      %s28 = sshll.u32 %s3, 4
      %s29 = int_to_ptr.hbm [resolvable:$true] %s28
      %s30 = sshll.u32 [#allocation2], 4
      %s31 = int_to_ptr.vmem [resolvable:$true] %s30
      %33 = dma.hbm_to_vmem [thread:$0]  %s29, 128, %s31, [#allocation3]
    $region17: #{tpu_custom_call.1} parent=1 // pred_fallthru
      _
    // Predicated region
    $region18: #{tpu_custom_call.1} parent=1 // pred_check
      _
    $region19: #{tpu_custom_call.1} parent=1 // pred_check_branch
      %35 = sbr.rel (0) target = $region21
    $region20: #{tpu_custom_call.1} parent=1 // pred_region
      _
    $region21: #{tpu_custom_call.1} parent=1 // pred_fallthru
      _
    // Predicated region
    $region22: #{tpu_custom_call.1} parent=1 // pred_check
      _
    $region23: #{tpu_custom_call.1} parent=1 // pred_check_branch
      %37 = sbr.rel (0) target = $region25
    $region24: #{tpu_custom_call.1} parent=1 // pred_region
      %39 = vsyncadd [#allocation6], 0
      %s41 = sshll.u32 %s5, 4
      %s42 = int_to_ptr.hbm [resolvable:$true] %s41
      %s43 = sshll.u32 [#allocation5], 4
      %s44 = int_to_ptr.vmem [resolvable:$true] %s43
      %46 = dma.hbm_to_vmem [thread:$0]  %s42, 128, %s44, [#allocation6]
    $region25: #{tpu_custom_call.1} parent=1 // pred_fallthru
      _
    // Predicated region
    $region26: #{tpu_custom_call.1} parent=1 // pred_check
      _
    $region27: #{tpu_custom_call.1} parent=1 // pred_check_branch
      %48 = sbr.rel (0) target = $region29
    $region28: #{tpu_custom_call.1} parent=1 // pred_region
      _
    $region29: #{tpu_custom_call.1} parent=1 // pred_fallthru
      _
    // Predicated region
    $region30: #{tpu_custom_call.1} parent=1 // pred_check
      _
    $region31: #{tpu_custom_call.1} parent=1 // pred_check_branch
      %50 = sbr.rel (0) target = $region33
    $region32: #{tpu_custom_call.1} parent=1 // pred_region
      _
    $region33: #{tpu_custom_call.1} parent=1 // pred_fallthru
      _
    // Predicated region
    $region34: #{tpu_custom_call.1} parent=1 // pred_check
      _
    $region35: #{tpu_custom_call.1} parent=1 // pred_check_branch
      %52 = sbr.rel (0) target = $region37
    $region36: #{tpu_custom_call.1} parent=1 // pred_region
      _
    $region37: #{tpu_custom_call.1} parent=1 // pred_fallthru
      _
    // Predicated region
    $region38: #{tpu_custom_call.1} parent=1 // pred_check
      _
    $region39: #{tpu_custom_call.1} parent=1 // pred_check_branch
      %54 = sbr.rel (0) target = $region41
    $region40: #{tpu_custom_call.1} parent=1 // pred_region
      %56 = dma.done [#allocation3], 128
    $region41: #{tpu_custom_call.1} parent=1 // pred_fallthru
      _
    // Predicated region
    $region42: #{tpu_custom_call.1} parent=1 // pred_check
      _
    $region43: #{tpu_custom_call.1} parent=1 // pred_check_branch
      %58 = sbr.rel (0) target = $region45
    $region44: #{tpu_custom_call.1} parent=1 // pred_region
      %60 = dma.done [#allocation6], 128
    $region45: #{tpu_custom_call.1} parent=1 // pred_fallthru
      _
    %v61 = vld [vmem:[%s0] sm:$0xff]
    %v62 = vld [vmem:[%s0 + $0x8] sm:$0x1f]
    %v63 = vld [vmem:[%s1] sm:$0xff]
    %v64 = vld [vmem:[%s1 + $0x8] sm:$0x3]
    %v65 = vld [vmem:[%s2] sm:$0xff]
    %v66 = vld [vmem:[%s2 + $0x8] sm:$0x3]
    %68 = vset.pattern.permute.xlu0 0
    %69 = vperm.xlu0 %68, %v65
    %v70 = vpop.permute.xlu0 %69
    %73 = vset.pattern.permute.xlu0 0
    %74 = vperm.xlu0 %73, %v66
    %v75 = vpop.permute.xlu0 %74
    %vm77 = vcmask 105472
    %v79 = vsel %vm77, %v63, 0
    %v82 = vsel %vm77, %v64, 0
    %vm84 = vcmask 1044480
    %v86 = vsel %vm84, %v62, 0
    %88 = vmatpush.msra.mxu0 0.0
    %89 = vmatpush.msra.mxu0 0.0
    %90 = vmatpush.msra.mxu0 0.0
    %91 = vmatpush.msra.mxu0 0.0
    %92 = vmatpush.msra.mxu0 0.0
    %93 = vmatpush.msra.mxu0 0.0
    %94 = vmatpush.msra.mxu0 0.0
    %95 = vmatpush.msra.mxu0 0.0
    %96 = vmatpush.msra.mxu0 0.0
    %97 = vmatpush.msra.mxu0 0.0
    %98 = vmatpush.msra.mxu0 0.0
    %99 = vmatpush.msra.mxu0 0.0
    %100 = vmatpush.msra.mxu0 0.0
    %101 = vmatpush.msra.mxu0 0.0
    %v102 = vand.u32 %v86, 4294901760
    %103 = vmatpush.msra.mxu0 %v102
    %v104 = vand.u32 %v61, 4294901760
    %105 = vmatpush.msra.mxu0 %v104
    %v106 = vand.u32 %v79, 4294901760
    %v107 = vsub.f32 %v79, %v106
    %v108 = vand.u32 %v107, 4294901760
    %v109 = vsub.f32 %v107, %v108
    %v110 = vand.u32 %v109, 4294901760
    %111 = vmatmul.f32.gmra.mxu0 %v110
    %v112 = vpop.f32.mrf.mxu0
    %v113 = vadd.f32 %v70, %v112
    %v114 = vand.u32 %v82, 4294901760
    %v115 = vsub.f32 %v82, %v114
    %v116 = vand.u32 %v115, 4294901760
    %v117 = vsub.f32 %v115, %v116
    %v118 = vand.u32 %v117, 4294901760
    %119 = vmatmul.f32.gmra.mxu0 %v118
    %v120 = vpop.f32.mrf.mxu0
    %v121 = vadd.f32 %v75, %v120
    %122 = vdwg.mxu0
    %123 = vmatpush.msra.mxu0 0.0
    %124 = vmatpush.msra.mxu0 0.0
    %125 = vmatpush.msra.mxu0 0.0
    %126 = vmatpush.msra.mxu0 0.0
    %127 = vmatpush.msra.mxu0 0.0
    %128 = vmatpush.msra.mxu0 0.0
    %129 = vmatpush.msra.mxu0 0.0
    %130 = vmatpush.msra.mxu0 0.0
    %131 = vmatpush.msra.mxu0 0.0
    %132 = vmatpush.msra.mxu0 0.0
    %133 = vmatpush.msra.mxu0 0.0
    %134 = vmatpush.msra.mxu0 0.0
    %135 = vmatpush.msra.mxu0 0.0
    %136 = vmatpush.msra.mxu0 0.0
    %v137 = vand.u32 %v86, 4294901760
    %v138 = vsub.f32 %v86, %v137
    %v139 = vand.u32 %v138, 4294901760
    %v140 = vsub.f32 %v138, %v139
    %v141 = vand.u32 %v140, 4294901760
    %142 = vmatpush.msra.mxu0 %v141
    %v143 = vand.u32 %v61, 4294901760
    %v144 = vsub.f32 %v61, %v143
    %v145 = vand.u32 %v144, 4294901760
    %v146 = vsub.f32 %v144, %v145
    %v147 = vand.u32 %v146, 4294901760
    %148 = vmatpush.msra.mxu0 %v147
    %v149 = vand.u32 %v79, 4294901760
    %150 = vmatmul.f32.gmra.mxu0 %v149
    %v151 = vpop.f32.mrf.mxu0
    %v152 = vadd.f32 %v113, %v151
    %v153 = vand.u32 %v82, 4294901760
    %154 = vmatmul.f32.gmra.mxu0 %v153
    %v155 = vpop.f32.mrf.mxu0
    %v156 = vadd.f32 %v121, %v155
    %157 = vdwg.mxu0
    %158 = vmatpush.msra.mxu0 0.0
    %159 = vmatpush.msra.mxu0 0.0
    %160 = vmatpush.msra.mxu0 0.0
    %161 = vmatpush.msra.mxu0 0.0
    %162 = vmatpush.msra.mxu0 0.0
    %163 = vmatpush.msra.mxu0 0.0
    %164 = vmatpush.msra.mxu0 0.0
    %165 = vmatpush.msra.mxu0 0.0
    %166 = vmatpush.msra.mxu0 0.0
    %167 = vmatpush.msra.mxu0 0.0
    %168 = vmatpush.msra.mxu0 0.0
    %169 = vmatpush.msra.mxu0 0.0
    %170 = vmatpush.msra.mxu0 0.0
    %171 = vmatpush.msra.mxu0 0.0
    %v172 = vand.u32 %v86, 4294901760
    %v173 = vsub.f32 %v86, %v172
    %174 = vmatpush.msra.mxu0 %v173
    %v175 = vand.u32 %v61, 4294901760
    %v176 = vsub.f32 %v61, %v175
    %177 = vmatpush.msra.mxu0 %v176
    %v178 = vand.u32 %v79, 4294901760
    %v179 = vsub.f32 %v79, %v178
    %180 = vmatmul.f32.gmra.mxu0 %v179
    %v181 = vpop.f32.mrf.mxu0
    %v182 = vadd.f32 %v152, %v181
    %v183 = vand.u32 %v82, 4294901760
    %v184 = vsub.f32 %v82, %v183
    %185 = vmatmul.f32.gmra.mxu0 %v184
    %v186 = vpop.f32.mrf.mxu0
    %v187 = vadd.f32 %v156, %v186
    %188 = vdwg.mxu0
    %189 = vmatpush.msra.mxu0 0.0
    %190 = vmatpush.msra.mxu0 0.0
    %191 = vmatpush.msra.mxu0 0.0
    %192 = vmatpush.msra.mxu0 0.0
    %193 = vmatpush.msra.mxu0 0.0
    %194 = vmatpush.msra.mxu0 0.0
    %195 = vmatpush.msra.mxu0 0.0
    %196 = vmatpush.msra.mxu0 0.0
    %197 = vmatpush.msra.mxu0 0.0
    %198 = vmatpush.msra.mxu0 0.0
    %199 = vmatpush.msra.mxu0 0.0
    %200 = vmatpush.msra.mxu0 0.0
    %201 = vmatpush.msra.mxu0 0.0
    %202 = vmatpush.msra.mxu0 0.0
    %v203 = vand.u32 %v86, 4294901760
    %204 = vmatpush.msra.mxu0 %v203
    %v205 = vand.u32 %v61, 4294901760
    %206 = vmatpush.msra.mxu0 %v205
    %v207 = vand.u32 %v79, 4294901760
    %v208 = vsub.f32 %v79, %v207
    %v209 = vand.u32 %v208, 4294901760
    %210 = vmatmul.f32.gmra.mxu0 %v209
    %v211 = vpop.f32.mrf.mxu0
    %v212 = vadd.f32 %v182, %v211
    %v213 = vand.u32 %v82, 4294901760
    %v214 = vsub.f32 %v82, %v213
    %v215 = vand.u32 %v214, 4294901760
    %216 = vmatmul.f32.gmra.mxu0 %v215
    %v217 = vpop.f32.mrf.mxu0
    %v218 = vadd.f32 %v187, %v217
    %219 = vdwg.mxu0
    %220 = vmatpush.msra.mxu0 0.0
    %221 = vmatpush.msra.mxu0 0.0
    %222 = vmatpush.msra.mxu0 0.0
    %223 = vmatpush.msra.mxu0 0.0
    %224 = vmatpush.msra.mxu0 0.0
    %225 = vmatpush.msra.mxu0 0.0
    %226 = vmatpush.msra.mxu0 0.0
    %227 = vmatpush.msra.mxu0 0.0
    %228 = vmatpush.msra.mxu0 0.0
    %229 = vmatpush.msra.mxu0 0.0
    %230 = vmatpush.msra.mxu0 0.0
    %231 = vmatpush.msra.mxu0 0.0
    %232 = vmatpush.msra.mxu0 0.0
    %233 = vmatpush.msra.mxu0 0.0
    %v234 = vand.u32 %v86, 4294901760
    %v235 = vsub.f32 %v86, %v234
    %v236 = vand.u32 %v235, 4294901760
    %237 = vmatpush.msra.mxu0 %v236
    %v238 = vand.u32 %v61, 4294901760
    %v239 = vsub.f32 %v61, %v238
    %v240 = vand.u32 %v239, 4294901760
    %241 = vmatpush.msra.mxu0 %v240
    %v242 = vand.u32 %v79, 4294901760
    %243 = vmatmul.f32.gmra.mxu0 %v242
    %v244 = vpop.f32.mrf.mxu0
    %v245 = vadd.f32 %v212, %v244
    %v246 = vand.u32 %v82, 4294901760
    %247 = vmatmul.f32.gmra.mxu0 %v246
    %v248 = vpop.f32.mrf.mxu0
    %v249 = vadd.f32 %v218, %v248
    %250 = vdwg.mxu0
    %251 = vmatpush.msra.mxu0 0.0
    %252 = vmatpush.msra.mxu0 0.0
    %253 = vmatpush.msra.mxu0 0.0
    %254 = vmatpush.msra.mxu0 0.0
    %255 = vmatpush.msra.mxu0 0.0
    %256 = vmatpush.msra.mxu0 0.0
    %257 = vmatpush.msra.mxu0 0.0
    %258 = vmatpush.msra.mxu0 0.0
    %259 = vmatpush.msra.mxu0 0.0
    %260 = vmatpush.msra.mxu0 0.0
    %261 = vmatpush.msra.mxu0 0.0
    %262 = vmatpush.msra.mxu0 0.0
    %263 = vmatpush.msra.mxu0 0.0
    %264 = vmatpush.msra.mxu0 0.0
    %v265 = vand.u32 %v86, 4294901760
    %266 = vmatpush.msra.mxu0 %v265
    %v267 = vand.u32 %v61, 4294901760
    %268 = vmatpush.msra.mxu0 %v267
    %v269 = vand.u32 %v79, 4294901760
    %270 = vmatmul.f32.gmra.mxu0 %v269
    %v271 = vpop.f32.mrf.mxu0
    %v272 = vadd.f32 %v245, %v271
    %v273 = vand.u32 %v82, 4294901760
    %274 = vmatmul.f32.gmra.mxu0 %v273
    %v275 = vpop.f32.mrf.mxu0
    %v276 = vadd.f32 %v249, %v275
    %277 = vdwg.mxu0
    %v278 = vtanh.pop %v272
    %v279 = vtanh.pop %v276
    %v280 = vld [vmem:[#allocation2] sm:$0xff]
    %v281 = vld [vmem:[%s4] sm:$0xff]
    %283 = vset.pattern.permute.xlu0 0
    %284 = vperm.xlu0 %283, %v281
    %v285 = vpop.permute.xlu0 %284
    %vm287 = vcmask 80896
    %v289 = vsel %vm287, %v280, 0
    %vm291 = vcmask 1041408
    %v293 = vsel %vm291, %v279, 0
    %295 = vmatpush.msra.mxu0 0.0
    %296 = vmatpush.msra.mxu0 0.0
    %297 = vmatpush.msra.mxu0 0.0
    %298 = vmatpush.msra.mxu0 0.0
    %299 = vmatpush.msra.mxu0 0.0
    %300 = vmatpush.msra.mxu0 0.0
    %301 = vmatpush.msra.mxu0 0.0
    %302 = vmatpush.msra.mxu0 0.0
    %303 = vmatpush.msra.mxu0 0.0
    %304 = vmatpush.msra.mxu0 0.0
    %305 = vmatpush.msra.mxu0 0.0
    %306 = vmatpush.msra.mxu0 0.0
    %307 = vmatpush.msra.mxu0 0.0
    %308 = vmatpush.msra.mxu0 0.0
    %v309 = vand.u32 %v293, 4294901760
    %310 = vmatpush.msra.mxu0 %v309
    %v311 = vand.u32 %v278, 4294901760
    %312 = vmatpush.msra.mxu0 %v311
    %v313 = vand.u32 %v289, 4294901760
    %v314 = vsub.f32 %v289, %v313
    %v315 = vand.u32 %v314, 4294901760
    %v316 = vsub.f32 %v314, %v315
    %v317 = vand.u32 %v316, 4294901760
    %318 = vmatmul.f32.gmra.mxu0 %v317
    %v319 = vpop.f32.mrf.mxu0
    %v320 = vadd.f32 %v285, %v319
    %321 = vdwg.mxu0
    %322 = vmatpush.msra.mxu0 0.0
    %323 = vmatpush.msra.mxu0 0.0
    %324 = vmatpush.msra.mxu0 0.0
    %325 = vmatpush.msra.mxu0 0.0
    %326 = vmatpush.msra.mxu0 0.0
    %327 = vmatpush.msra.mxu0 0.0
    %328 = vmatpush.msra.mxu0 0.0
    %329 = vmatpush.msra.mxu0 0.0
    %330 = vmatpush.msra.mxu0 0.0
    %331 = vmatpush.msra.mxu0 0.0
    %332 = vmatpush.msra.mxu0 0.0
    %333 = vmatpush.msra.mxu0 0.0
    %334 = vmatpush.msra.mxu0 0.0
    %335 = vmatpush.msra.mxu0 0.0
    %v336 = vand.u32 %v293, 4294901760
    %v337 = vsub.f32 %v293, %v336
    %v338 = vand.u32 %v337, 4294901760
    %v339 = vsub.f32 %v337, %v338
    %v340 = vand.u32 %v339, 4294901760
    %341 = vmatpush.msra.mxu0 %v340
    %v342 = vand.u32 %v278, 4294901760
    %v343 = vsub.f32 %v278, %v342
    %v344 = vand.u32 %v343, 4294901760
    %v345 = vsub.f32 %v343, %v344
    %v346 = vand.u32 %v345, 4294901760
    %347 = vmatpush.msra.mxu0 %v346
    %v348 = vand.u32 %v289, 4294901760
    %349 = vmatmul.f32.gmra.mxu0 %v348
    %v350 = vpop.f32.mrf.mxu0
    %v351 = vadd.f32 %v320, %v350
    %352 = vdwg.mxu0
    %353 = vmatpush.msra.mxu0 0.0
    %354 = vmatpush.msra.mxu0 0.0
    %355 = vmatpush.msra.mxu0 0.0
    %356 = vmatpush.msra.mxu0 0.0
    %357 = vmatpush.msra.mxu0 0.0
    %358 = vmatpush.msra.mxu0 0.0
    %359 = vmatpush.msra.mxu0 0.0
    %360 = vmatpush.msra.mxu0 0.0
    %361 = vmatpush.msra.mxu0 0.0
    %362 = vmatpush.msra.mxu0 0.0
    %363 = vmatpush.msra.mxu0 0.0
    %364 = vmatpush.msra.mxu0 0.0
    %365 = vmatpush.msra.mxu0 0.0
    %366 = vmatpush.msra.mxu0 0.0
    %v367 = vand.u32 %v293, 4294901760
    %v368 = vsub.f32 %v293, %v367
    %369 = vmatpush.msra.mxu0 %v368
    %v370 = vand.u32 %v278, 4294901760
    %v371 = vsub.f32 %v278, %v370
    %372 = vmatpush.msra.mxu0 %v371
    %v373 = vand.u32 %v289, 4294901760
    %v374 = vsub.f32 %v289, %v373
    %375 = vmatmul.f32.gmra.mxu0 %v374
    %v376 = vpop.f32.mrf.mxu0
    %v377 = vadd.f32 %v351, %v376
    %378 = vdwg.mxu0
    %379 = vmatpush.msra.mxu0 0.0
    %380 = vmatpush.msra.mxu0 0.0
    %381 = vmatpush.msra.mxu0 0.0
    %382 = vmatpush.msra.mxu0 0.0
    %383 = vmatpush.msra.mxu0 0.0
    %384 = vmatpush.msra.mxu0 0.0
    %385 = vmatpush.msra.mxu0 0.0
    %386 = vmatpush.msra.mxu0 0.0
    %387 = vmatpush.msra.mxu0 0.0
    %388 = vmatpush.msra.mxu0 0.0
    %389 = vmatpush.msra.mxu0 0.0
    %390 = vmatpush.msra.mxu0 0.0
    %391 = vmatpush.msra.mxu0 0.0
    %392 = vmatpush.msra.mxu0 0.0
    %v393 = vand.u32 %v293, 4294901760
    %394 = vmatpush.msra.mxu0 %v393
    %v395 = vand.u32 %v278, 4294901760
    %396 = vmatpush.msra.mxu0 %v395
    %v397 = vand.u32 %v289, 4294901760
    %v398 = vsub.f32 %v289, %v397
    %v399 = vand.u32 %v398, 4294901760
    %400 = vmatmul.f32.gmra.mxu0 %v399
    %v401 = vpop.f32.mrf.mxu0
    %v402 = vadd.f32 %v377, %v401
    %403 = vdwg.mxu0
    %404 = vmatpush.msra.mxu0 0.0
    %405 = vmatpush.msra.mxu0 0.0
    %406 = vmatpush.msra.mxu0 0.0
    %407 = vmatpush.msra.mxu0 0.0
    %408 = vmatpush.msra.mxu0 0.0
    %409 = vmatpush.msra.mxu0 0.0
    %410 = vmatpush.msra.mxu0 0.0
    %411 = vmatpush.msra.mxu0 0.0
    %412 = vmatpush.msra.mxu0 0.0
    %413 = vmatpush.msra.mxu0 0.0
    %414 = vmatpush.msra.mxu0 0.0
    %415 = vmatpush.msra.mxu0 0.0
    %416 = vmatpush.msra.mxu0 0.0
    %417 = vmatpush.msra.mxu0 0.0
    %v418 = vand.u32 %v293, 4294901760
    %v419 = vsub.f32 %v293, %v418
    %v420 = vand.u32 %v419, 4294901760
    %421 = vmatpush.msra.mxu0 %v420
    %v422 = vand.u32 %v278, 4294901760
    %v423 = vsub.f32 %v278, %v422
    %v424 = vand.u32 %v423, 4294901760
    %425 = vmatpush.msra.mxu0 %v424
    %v426 = vand.u32 %v289, 4294901760
    %427 = vmatmul.f32.gmra.mxu0 %v426
    %v428 = vpop.f32.mrf.mxu0
    %v429 = vadd.f32 %v402, %v428
    %430 = vdwg.mxu0
    %431 = vmatpush.msra.mxu0 0.0
    %432 = vmatpush.msra.mxu0 0.0
    %433 = vmatpush.msra.mxu0 0.0
    %434 = vmatpush.msra.mxu0 0.0
    %435 = vmatpush.msra.mxu0 0.0
    %436 = vmatpush.msra.mxu0 0.0
    %437 = vmatpush.msra.mxu0 0.0
    %438 = vmatpush.msra.mxu0 0.0
    %439 = vmatpush.msra.mxu0 0.0
    %440 = vmatpush.msra.mxu0 0.0
    %441 = vmatpush.msra.mxu0 0.0
    %442 = vmatpush.msra.mxu0 0.0
    %443 = vmatpush.msra.mxu0 0.0
    %444 = vmatpush.msra.mxu0 0.0
    %v445 = vand.u32 %v293, 4294901760
    %446 = vmatpush.msra.mxu0 %v445
    %v447 = vand.u32 %v278, 4294901760
    %448 = vmatpush.msra.mxu0 %v447
    %v449 = vand.u32 %v289, 4294901760
    %450 = vmatmul.f32.gmra.mxu0 %v449
    %v451 = vpop.f32.mrf.mxu0
    %v452 = vadd.f32 %v429, %v451
    %453 = vdwg.mxu0
    %v454 = vtanh.pop %v452
    %v455 = vld [vmem:[#allocation5] sm:$0x1f]
    %v456 = vld [vmem:[%s6] sm:$0x1f]
    %458 = vset.pattern.permute.xlu0 0
    %459 = vperm.xlu0 %458, %v456
    %v460 = vpop.permute.xlu0 %459
    %vm462 = vcmask 64512
    %v464 = vsel %vm462, %v455, 0
    %466 = vmatpush.msra.mxu0 0.0
    %467 = vmatpush.msra.mxu0 0.0
    %468 = vmatpush.msra.mxu0 0.0
    %469 = vmatpush.msra.mxu0 0.0
    %470 = vmatpush.msra.mxu0 0.0
    %471 = vmatpush.msra.mxu0 0.0
    %472 = vmatpush.msra.mxu0 0.0
    %473 = vmatpush.msra.mxu0 0.0
    %474 = vmatpush.msra.mxu0 0.0
    %475 = vmatpush.msra.mxu0 0.0
    %476 = vmatpush.msra.mxu0 0.0
    %477 = vmatpush.msra.mxu0 0.0
    %478 = vmatpush.msra.mxu0 0.0
    %479 = vmatpush.msra.mxu0 0.0
    %480 = vmatpush.msra.mxu0 0.0
    %v481 = vand.u32 %v454, 4294901760
    %482 = vmatpush.msra.mxu0 %v481
    %v483 = vand.u32 %v464, 4294901760
    %v484 = vsub.f32 %v464, %v483
    %v485 = vand.u32 %v484, 4294901760
    %v486 = vsub.f32 %v484, %v485
    %v487 = vand.u32 %v486, 4294901760
    %488 = vmatmul.f32.gmra.mxu0 %v487
    %v489 = vpop.f32.mrf.mxu0
    %v490 = vadd.f32 %v460, %v489
    %491 = vdwg.mxu0
    %492 = vmatpush.msra.mxu0 0.0
    %493 = vmatpush.msra.mxu0 0.0
    %494 = vmatpush.msra.mxu0 0.0
    %495 = vmatpush.msra.mxu0 0.0
    %496 = vmatpush.msra.mxu0 0.0
    %497 = vmatpush.msra.mxu0 0.0
    %498 = vmatpush.msra.mxu0 0.0
    %499 = vmatpush.msra.mxu0 0.0
    %500 = vmatpush.msra.mxu0 0.0
    %501 = vmatpush.msra.mxu0 0.0
    %502 = vmatpush.msra.mxu0 0.0
    %503 = vmatpush.msra.mxu0 0.0
    %504 = vmatpush.msra.mxu0 0.0
    %505 = vmatpush.msra.mxu0 0.0
    %506 = vmatpush.msra.mxu0 0.0
    %v507 = vand.u32 %v454, 4294901760
    %v508 = vsub.f32 %v454, %v507
    %v509 = vand.u32 %v508, 4294901760
    %v510 = vsub.f32 %v508, %v509
    %v511 = vand.u32 %v510, 4294901760
    %512 = vmatpush.msra.mxu0 %v511
    %v513 = vand.u32 %v464, 4294901760
    %514 = vmatmul.f32.gmra.mxu0 %v513
    %v515 = vpop.f32.mrf.mxu0
    %v516 = vadd.f32 %v490, %v515
    %517 = vdwg.mxu0
    %518 = vmatpush.msra.mxu0 0.0
    %519 = vmatpush.msra.mxu0 0.0
    %520 = vmatpush.msra.mxu0 0.0
    %521 = vmatpush.msra.mxu0 0.0
    %522 = vmatpush.msra.mxu0 0.0
    %523 = vmatpush.msra.mxu0 0.0
    %524 = vmatpush.msra.mxu0 0.0
    %525 = vmatpush.msra.mxu0 0.0
    %526 = vmatpush.msra.mxu0 0.0
    %527 = vmatpush.msra.mxu0 0.0
    %528 = vmatpush.msra.mxu0 0.0
    %529 = vmatpush.msra.mxu0 0.0
    %530 = vmatpush.msra.mxu0 0.0
    %531 = vmatpush.msra.mxu0 0.0
    %532 = vmatpush.msra.mxu0 0.0
    %v533 = vand.u32 %v454, 4294901760
    %v534 = vsub.f32 %v454, %v533
    %535 = vmatpush.msra.mxu0 %v534
    %v536 = vand.u32 %v464, 4294901760
    %v537 = vsub.f32 %v464, %v536
    %538 = vmatmul.f32.gmra.mxu0 %v537
    %v539 = vpop.f32.mrf.mxu0
    %v540 = vadd.f32 %v516, %v539
    %541 = vdwg.mxu0
    %542 = vmatpush.msra.mxu0 0.0
    %543 = vmatpush.msra.mxu0 0.0
    %544 = vmatpush.msra.mxu0 0.0
    %545 = vmatpush.msra.mxu0 0.0
    %546 = vmatpush.msra.mxu0 0.0
    %547 = vmatpush.msra.mxu0 0.0
    %548 = vmatpush.msra.mxu0 0.0
    %549 = vmatpush.msra.mxu0 0.0
    %550 = vmatpush.msra.mxu0 0.0
    %551 = vmatpush.msra.mxu0 0.0
    %552 = vmatpush.msra.mxu0 0.0
    %553 = vmatpush.msra.mxu0 0.0
    %554 = vmatpush.msra.mxu0 0.0
    %555 = vmatpush.msra.mxu0 0.0
    %556 = vmatpush.msra.mxu0 0.0
    %v557 = vand.u32 %v454, 4294901760
    %558 = vmatpush.msra.mxu0 %v557
    %v559 = vand.u32 %v464, 4294901760
    %v560 = vsub.f32 %v464, %v559
    %v561 = vand.u32 %v560, 4294901760
    %562 = vmatmul.f32.gmra.mxu0 %v561
    %v563 = vpop.f32.mrf.mxu0
    %v564 = vadd.f32 %v540, %v563
    %565 = vdwg.mxu0
    %566 = vmatpush.msra.mxu0 0.0
    %567 = vmatpush.msra.mxu0 0.0
    %568 = vmatpush.msra.mxu0 0.0
    %569 = vmatpush.msra.mxu0 0.0
    %570 = vmatpush.msra.mxu0 0.0
    %571 = vmatpush.msra.mxu0 0.0
    %572 = vmatpush.msra.mxu0 0.0
    %573 = vmatpush.msra.mxu0 0.0
    %574 = vmatpush.msra.mxu0 0.0
    %575 = vmatpush.msra.mxu0 0.0
    %576 = vmatpush.msra.mxu0 0.0
    %577 = vmatpush.msra.mxu0 0.0
    %578 = vmatpush.msra.mxu0 0.0
    %579 = vmatpush.msra.mxu0 0.0
    %580 = vmatpush.msra.mxu0 0.0
    %v581 = vand.u32 %v454, 4294901760
    %v582 = vsub.f32 %v454, %v581
    %v583 = vand.u32 %v582, 4294901760
    %584 = vmatpush.msra.mxu0 %v583
    %v585 = vand.u32 %v464, 4294901760
    %586 = vmatmul.f32.gmra.mxu0 %v585
    %v587 = vpop.f32.mrf.mxu0
    %v588 = vadd.f32 %v564, %v587
    %589 = vdwg.mxu0
    %590 = vmatpush.msra.mxu0 0.0
    %591 = vmatpush.msra.mxu0 0.0
    %592 = vmatpush.msra.mxu0 0.0
    %593 = vmatpush.msra.mxu0 0.0
    %594 = vmatpush.msra.mxu0 0.0
    %595 = vmatpush.msra.mxu0 0.0
    %596 = vmatpush.msra.mxu0 0.0
    %597 = vmatpush.msra.mxu0 0.0
    %598 = vmatpush.msra.mxu0 0.0
    %599 = vmatpush.msra.mxu0 0.0
    %600 = vmatpush.msra.mxu0 0.0
    %601 = vmatpush.msra.mxu0 0.0
    %602 = vmatpush.msra.mxu0 0.0
    %603 = vmatpush.msra.mxu0 0.0
    %604 = vmatpush.msra.mxu0 0.0
    %v605 = vand.u32 %v454, 4294901760
    %606 = vmatpush.msra.mxu0 %v605
    %v607 = vand.u32 %v464, 4294901760
    %608 = vmatmul.f32.gmra.mxu0 %v607
    %v609 = vpop.f32.mrf.mxu0
    %v610 = vadd.f32 %v588, %v609
    %611 = vdwg.mxu0
    %v612 = vtanh.pop %v610
    %v613 = vld [vmem:[%s7] sm:$0x7]
    %v614 = vld [vmem:[%s8] sm:$0x7]
    %616 = vset.pattern.permute.xlu0 0
    %617 = vperm.xlu0 %616, %v614
    %v618 = vpop.permute.xlu0 %617
    %vm620 = vcmask 39936
    %v622 = vsel %vm620, %v613, 0
    %v625 = vsel %vm84, %v612, 0
    %627 = vmatpush.msra.mxu0 0.0
    %628 = vmatpush.msra.mxu0 0.0
    %629 = vmatpush.msra.mxu0 0.0
    %630 = vmatpush.msra.mxu0 0.0
    %631 = vmatpush.msra.mxu0 0.0
    %632 = vmatpush.msra.mxu0 0.0
    %633 = vmatpush.msra.mxu0 0.0
    %634 = vmatpush.msra.mxu0 0.0
    %635 = vmatpush.msra.mxu0 0.0
    %636 = vmatpush.msra.mxu0 0.0
    %637 = vmatpush.msra.mxu0 0.0
    %638 = vmatpush.msra.mxu0 0.0
    %639 = vmatpush.msra.mxu0 0.0
    %640 = vmatpush.msra.mxu0 0.0
    %641 = vmatpush.msra.mxu0 0.0
    %v642 = vand.u32 %v625, 4294901760
    %643 = vmatpush.msra.mxu0 %v642
    %v644 = vand.u32 %v622, 4294901760
    %v645 = vsub.f32 %v622, %v644
    %v646 = vand.u32 %v645, 4294901760
    %v647 = vsub.f32 %v645, %v646
    %v648 = vand.u32 %v647, 4294901760
    %649 = vmatmul.f32.gmra.mxu0 %v648
    %v650 = vpop.f32.mrf.mxu0
    %v651 = vadd.f32 %v618, %v650
    %652 = vdwg.mxu0
    %653 = vmatpush.msra.mxu0 0.0
    %654 = vmatpush.msra.mxu0 0.0
    %655 = vmatpush.msra.mxu0 0.0
    %656 = vmatpush.msra.mxu0 0.0
    %657 = vmatpush.msra.mxu0 0.0
    %658 = vmatpush.msra.mxu0 0.0
    %659 = vmatpush.msra.mxu0 0.0
    %660 = vmatpush.msra.mxu0 0.0
    %661 = vmatpush.msra.mxu0 0.0
    %662 = vmatpush.msra.mxu0 0.0
    %663 = vmatpush.msra.mxu0 0.0
    %664 = vmatpush.msra.mxu0 0.0
    %665 = vmatpush.msra.mxu0 0.0
    %666 = vmatpush.msra.mxu0 0.0
    %667 = vmatpush.msra.mxu0 0.0
    %v668 = vand.u32 %v625, 4294901760
    %v669 = vsub.f32 %v625, %v668
    %v670 = vand.u32 %v669, 4294901760
    %v671 = vsub.f32 %v669, %v670
    %v672 = vand.u32 %v671, 4294901760
    %673 = vmatpush.msra.mxu0 %v672
    %v674 = vand.u32 %v622, 4294901760
    %675 = vmatmul.f32.gmra.mxu0 %v674
    %v676 = vpop.f32.mrf.mxu0
    %v677 = vadd.f32 %v651, %v676
    %678 = vdwg.mxu0
    %679 = vmatpush.msra.mxu0 0.0
    %680 = vmatpush.msra.mxu0 0.0
    %681 = vmatpush.msra.mxu0 0.0
    %682 = vmatpush.msra.mxu0 0.0
    %683 = vmatpush.msra.mxu0 0.0
    %684 = vmatpush.msra.mxu0 0.0
    %685 = vmatpush.msra.mxu0 0.0
    %686 = vmatpush.msra.mxu0 0.0
    %687 = vmatpush.msra.mxu0 0.0
    %688 = vmatpush.msra.mxu0 0.0
    %689 = vmatpush.msra.mxu0 0.0
    %690 = vmatpush.msra.mxu0 0.0
    %691 = vmatpush.msra.mxu0 0.0
    %692 = vmatpush.msra.mxu0 0.0
    %693 = vmatpush.msra.mxu0 0.0
    %v694 = vand.u32 %v625, 4294901760
    %v695 = vsub.f32 %v625, %v694
    %696 = vmatpush.msra.mxu0 %v695
    %v697 = vand.u32 %v622, 4294901760
    %v698 = vsub.f32 %v622, %v697
    %699 = vmatmul.f32.gmra.mxu0 %v698
    %v700 = vpop.f32.mrf.mxu0
    %v701 = vadd.f32 %v677, %v700
    %702 = vdwg.mxu0
    %703 = vmatpush.msra.mxu0 0.0
    %704 = vmatpush.msra.mxu0 0.0
    %705 = vmatpush.msra.mxu0 0.0
    %706 = vmatpush.msra.mxu0 0.0
    %707 = vmatpush.msra.mxu0 0.0
    %708 = vmatpush.msra.mxu0 0.0
    %709 = vmatpush.msra.mxu0 0.0
    %710 = vmatpush.msra.mxu0 0.0
    %711 = vmatpush.msra.mxu0 0.0
    %712 = vmatpush.msra.mxu0 0.0
    %713 = vmatpush.msra.mxu0 0.0
    %714 = vmatpush.msra.mxu0 0.0
    %715 = vmatpush.msra.mxu0 0.0
    %716 = vmatpush.msra.mxu0 0.0
    %717 = vmatpush.msra.mxu0 0.0
    %v718 = vand.u32 %v625, 4294901760
    %719 = vmatpush.msra.mxu0 %v718
    %v720 = vand.u32 %v622, 4294901760
    %v721 = vsub.f32 %v622, %v720
    %v722 = vand.u32 %v721, 4294901760
    %723 = vmatmul.f32.gmra.mxu0 %v722
    %v724 = vpop.f32.mrf.mxu0
    %v725 = vadd.f32 %v701, %v724
    %726 = vdwg.mxu0
    %727 = vmatpush.msra.mxu0 0.0
    %728 = vmatpush.msra.mxu0 0.0
    %729 = vmatpush.msra.mxu0 0.0
    %730 = vmatpush.msra.mxu0 0.0
    %731 = vmatpush.msra.mxu0 0.0
    %732 = vmatpush.msra.mxu0 0.0
    %733 = vmatpush.msra.mxu0 0.0
    %734 = vmatpush.msra.mxu0 0.0
    %735 = vmatpush.msra.mxu0 0.0
    %736 = vmatpush.msra.mxu0 0.0
    %737 = vmatpush.msra.mxu0 0.0
    %738 = vmatpush.msra.mxu0 0.0
    %739 = vmatpush.msra.mxu0 0.0
    %740 = vmatpush.msra.mxu0 0.0
    %741 = vmatpush.msra.mxu0 0.0
    %v742 = vand.u32 %v625, 4294901760
    %v743 = vsub.f32 %v625, %v742
    %v744 = vand.u32 %v743, 4294901760
    %745 = vmatpush.msra.mxu0 %v744
    %v746 = vand.u32 %v622, 4294901760
    %747 = vmatmul.f32.gmra.mxu0 %v746
    %v748 = vpop.f32.mrf.mxu0
    %v749 = vadd.f32 %v725, %v748
    %750 = vdwg.mxu0
    %751 = vmatpush.msra.mxu0 0.0
    %752 = vmatpush.msra.mxu0 0.0
    %753 = vmatpush.msra.mxu0 0.0
    %754 = vmatpush.msra.mxu0 0.0
    %755 = vmatpush.msra.mxu0 0.0
    %756 = vmatpush.msra.mxu0 0.0
    %757 = vmatpush.msra.mxu0 0.0
    %758 = vmatpush.msra.mxu0 0.0
    %759 = vmatpush.msra.mxu0 0.0
    %760 = vmatpush.msra.mxu0 0.0
    %761 = vmatpush.msra.mxu0 0.0
    %762 = vmatpush.msra.mxu0 0.0
    %763 = vmatpush.msra.mxu0 0.0
    %764 = vmatpush.msra.mxu0 0.0
    %765 = vmatpush.msra.mxu0 0.0
    %v766 = vand.u32 %v625, 4294901760
    %767 = vmatpush.msra.mxu0 %v766
    %v768 = vand.u32 %v622, 4294901760
    %769 = vmatmul.f32.gmra.mxu0 %v768
    %v770 = vpop.f32.mrf.mxu0
    %v771 = vadd.f32 %v749, %v770
    %772 = vdwg.mxu0
    %vm773 = vcmask 1042432
    %v774 = vsel %vm773, %v771, -inf
    %v775 = vrot.slane %v774, 4
    %v776 = vmax.f32 %v774, %v775
    %v777 = vrot.slane %v776, 2
    %v778 = vmax.f32 %v776, %v777
    %v779 = vrot.slane %v778, 1
    %v780 = vmax.f32 %v778, %v779
    %v781 = vsub.f32 %v771, %v780
    %v782 = vmul.f32 %v781, 1.442695
    %v783 = vpow.pop %v782
    %v784 = vsel %vm773, %v783, 0.0
    %v785 = vrot.slane %v784, 4
    %v786 = vadd.f32 %v784, %v785
    %v787 = vrot.slane %v786, 2
    %v788 = vadd.f32 %v786, %v787
    %v789 = vrot.slane %v788, 1
    %v790 = vadd.f32 %v788, %v789
    %v791 = vrcp.pop %v790
    %v792 = vmul.f32 %v790, %v791
    %v793 = vsub.f32 1.0, %v792
    %v794 = vmul.f32 %v791, %v793
    %v795 = vadd.f32 %v791, %v794
    %vm796 = vweird.f32 %v790
    %vm797 = vweird.f32 %v791
    %vm798 = vmor %vm796, %vm797
    %v799 = vsel %vm798, %v791, %v795
    %v800 = vand.u32 2147483647, %v790
    %vm801 = vcmp.eq.f32.partialorder %v800, 8.507059e+37
    %v802 = vand.u32 %v790, 2147483648
    %v803 = vor.u32 1.1754944e-38, %v802
    %v804 = vsel %vm801, %v803, %v799
    %v805 = vmul.f32 1.0, %v804
    %v806 = vmul.f32 %v783, %v805
    %807 = vst [vmem:[#allocation7] sm:$0x7] %v806
    // Predicated region
    $region46: #{tpu_custom_call.1} parent=1 // pred_check
      _
    $region47: #{tpu_custom_call.1} parent=1 // pred_check_branch
      %809 = sbr.rel (0) target = $region49
    $region48: #{tpu_custom_call.1} parent=1 // pred_region
      %811 = vsyncadd [#allocation4], 0
      %s813 = sshll.u32 [#allocation7], 4
      %s814 = int_to_ptr.vmem [resolvable:$true] %s813
      %s815 = sshll.u32 %s9, 4
      %s816 = int_to_ptr.hbm [resolvable:$true] %s815
      %818 = dma.vmem_to_hbm [thread:$0]  %s814, 64, %s816, [#allocation4]
    $region49: #{tpu_custom_call.1} parent=1 // pred_fallthru
      _
    // Predicated region
    $region50: #{tpu_custom_call.1} parent=1 // pred_check
      _
    $region51: #{tpu_custom_call.1} parent=1 // pred_check_branch
      %820 = sbr.rel (0) target = $region53
    $region52: #{tpu_custom_call.1} parent=1 // pred_region
      %822 = dma.done [#allocation4], 64
    $region53: #{tpu_custom_call.1} parent=1 // pred_fallthru
      _
    %823 = vsyncpa [#allocation3], 1
    %824 = vsyncpa [#allocation6], 1
    %825 = vsyncpa [#allocation4], 1

</llo_original>
